<compile_context>
chip_gen: v6e
topology: v6e:2x2x1
jax: 0.10.0
libtpu: 0.0.40
codegen_flags: <defaults>
</compile_context>

<pallas_src>
import jax
import jax.numpy as jnp
from jax import lax
from jax.experimental import pallas as pl
from jax.experimental.pallas import tpu as pltpu

EPS = 1e-5


def _make_basenode_kernel(H, W, split, B):
    """Kernel body for one grid step: x block (B, 2*split, H*W)."""
    HW = H * W

    # Static (tap index, lane shift) pairs for the 8 non-centre 3x3 taps.
    # shifted[l] = t[(l + di*W + dj) mod HW]  (wrap-around lanes are masked to
    # zero by the precomputed coefficient planes).
    tap_shifts = []
    for di in (-1, 0, 1):
        for dj in (-1, 0, 1):
            if di == 0 and dj == 0:
                continue
            k = (di + 1) * 3 + (dj + 1)
            shift = (-(di * W + dj)) % HW
            tap_shifts.append((k, shift))

    def kernel(x_ref, w1_ref, w3_ref, tap_ref, bias_ref, out_ref):
        # Resident (constant index_map) parameters.
        w1 = w1_ref[...]                       # (split, split) bf16, BN1 folded
        w3 = w3_ref[...]                       # (split, split) bf16, BN3 folded
        bias = bias_ref[...]                   # (split, 3) f32
        b1 = bias[:, 0:1]
        b2 = bias[:, 1:2]
        b3 = bias[:, 2:3]

        # Unrolled over the B batch elements of this grid step (B is small and
        # chosen by the wrapper so the block fits the VMEM budget).  Slicing
        # x_ref / out_ref per element keeps live vreg ranges bounded.
        for b in range(B):
            # --- 1x1 conv #1 (+BN1 bias, ReLU): bf16 MXU inputs, f32 acc ----
            x2 = x_ref[b, split:, :].astype(jnp.bfloat16)      # (split, HW)
            t = jnp.dot(w1, x2, preferred_element_type=jnp.float32)
            t = jnp.maximum(t + b1, 0.0)

            # --- depthwise 3x3, stride 1, pad 1 (BN2 scale folded in) -------
            # tap_ref[k] = dw_tap[k] (per channel) * boundary mask (per lane),
            # precomputed in the wrapper -> each tap = roll + mul + add.
            acc = tap_ref[4] * t                               # centre tap
            for k, shift in tap_shifts:
                acc = acc + tap_ref[k] * pltpu.roll(t, shift=shift, axis=1)
            t2 = acc + b2                                      # BN2 bias, no ReLU

            # --- 1x1 conv #2 (+BN3 bias, ReLU) ------------------------------
            y = jnp.dot(w3, t2.astype(jnp.bfloat16),
                        preferred_element_type=jnp.float32)
            y = jnp.maximum(y + b3, 0.0)

            # --- fused cat + channel_shuffle(G=2) ---------------------------
            # out viewed as (split, 2, H, W): [:, 0] = x1, [:, 1] = b2(x2).
            # Two lane-aligned dense slabs of the (split, 2*HW) block.
            out_ref[b, :, :HW] = x_ref[b, :split, :].astype(out_ref.dtype)
            out_ref[b, :, HW:] = y.astype(out_ref.dtype)

    return kernel


def _fold_bn(gamma, beta, mean, var):
    scale = gamma / jnp.sqrt(var + EPS)
    bias = beta - mean * scale
    return scale.astype(jnp.float32), bias.astype(jnp.float32)


def _pick_block_batch(N, per_elem_bytes, budget_bytes=8 << 20):
    """Largest divisor-of-N block batch whose double-buffered in+out footprint
    stays under `budget_bytes` (comfortably inside v7x's 32 MiB default scoped
    VMEM), while keeping >= 2 grid steps when N allows (v7x has 2 TCs)."""
    b = max(1, budget_bytes // (2 * per_elem_bytes))   # x2: double buffering
    if N >= 2:
        b = min(b, N // 2)                             # >= 2 grid steps
    b = int(max(1, min(b, N)))
    while N % b:
        b -= 1
    return b


def basenode_forward(x_nchw, params):
    """BaseNode forward, stride=1.  x_nchw: (N, C, H, W) -> (N, C, H, W)."""
    N, C, H, W = x_nchw.shape
    split = C // 2
    HW = H * W
    assert C == 2 * split and split % 8 == 0, "channel split must be sublane aligned"

    s1, b1 = _fold_bn(*params["bn1"])
    s2, b2 = _fold_bn(*params["bn2"])
    s3, b3 = _fold_bn(*params["bn3"])

    # Fold BN scales into the conv weights; 1x1 weights become bf16 MXU
    # operands, per-channel biases stay f32.
    w1f = (params["w1"].astype(jnp.float32) * s1[:, None]).astype(jnp.bfloat16)
    w3f = (params["w3"].astype(jnp.float32) * s3[:, None]).astype(jnp.bfloat16)
    dwf = params["dw"].reshape(split, 9).astype(jnp.float32) * s2[:, None]

    # Precomputed per-tap coefficient * boundary-mask planes: (9, split, HW).
    lane = jnp.arange(HW, dtype=jnp.int32)
    row = lane // W
    col = lane % W
    masks = []
    for di in (-1, 0, 1):
        for dj in (-1, 0, 1):
            ok = ((row + di >= 0) & (row + di < H) &
                  (col + dj >= 0) & (col + dj < W))
            masks.append(ok.astype(jnp.float32))
    mask = jnp.stack(masks, axis=0)                      # (9, HW)
    tapcoef = dwf.T[:, :, None] * mask[:, None, :]       # (9, split, HW) f32

    bias = jnp.stack([b1, b2, b3], axis=1)               # (split, 3) f32

    # Free reshape (no dtype cast): NCHW kept, spatial flattened onto lanes.
    x_flat = x_nchw.reshape(N, C, HW)

    itemsize = x_nchw.dtype.itemsize
    B = _pick_block_batch(N, per_elem_bytes=2 * C * HW * itemsize)

    out = pl.pallas_call(
        _make_basenode_kernel(H, W, split, B),
        out_shape=jax.ShapeDtypeStruct((N, split, 2 * HW), x_nchw.dtype),
        grid_spec=pltpu.PrefetchScalarGridSpec(
            num_scalar_prefetch=0,
            grid=(N // B,),
            in_specs=[
                pl.BlockSpec((B, C, HW), lambda g: (g, 0, 0)),      # x slab
                pl.BlockSpec((split, split), lambda g: (0, 0)),     # folded w1
                pl.BlockSpec((split, split), lambda g: (0, 0)),     # folded w3
                pl.BlockSpec((9, split, HW), lambda g: (0, 0, 0)),  # tap planes
                pl.BlockSpec((split, 3), lambda g: (0, 0)),         # biases
            ],
            out_specs=pl.BlockSpec((B, split, 2 * HW), lambda g: (g, 0, 0)),
        ),
        compiler_params=pltpu.CompilerParams(
            dimension_semantics=("parallel",)),
    )(x_flat, w1f, w3f, tapcoef, bias)

    # (N, split, 2*HW) -> (N, split, 2, H, W) -> (N, C, H, W): contiguous, free.
    return out.reshape(N, split, 2, H, W).reshape(N, C, H, W)


def basenode_reference(x, params):
    """Pure-JAX reference mirroring the PyTorch forward (inference-mode BN)."""
    N, C, H, W = x.shape
    split = C // 2
    x1, x2 = x[:, :split], x[:, split:]

    def bn(t, g, b, m, v):
        r = lambda a: a[None, :, None, None]
        return (t - r(m)) / jnp.sqrt(r(v) + EPS) * r(g) + r(b)

    dn = ("NCHW", "OIHW", "NCHW")
    t = lax.conv_general_dilated(x2, params["w1"][:, :, None, None], (1, 1),
                                 "VALID", dimension_numbers=dn)
    t = jax.nn.relu(bn(t, *params["bn1"]))
    t = lax.conv_general_dilated(t, params["dw"], (1, 1), ((1, 1), (1, 1)),
                                 dimension_numbers=dn, feature_group_count=split)
    t = bn(t, *params["bn2"])
    t = lax.conv_general_dilated(t, params["w3"][:, :, None, None], (1, 1),
                                 "VALID", dimension_numbers=dn)
    t = jax.nn.relu(bn(t, *params["bn3"]))

    y = jnp.concatenate([x1, t], axis=1)
    y = y.reshape(N, 2, C // 2, H, W).transpose(0, 2, 1, 3, 4).reshape(N, C, H, W)
    return y


def make_params(key, split):
    ks = jax.random.split(key, 16)

    def bn_params(k0, k1, k2, k3):
        gamma = 1.0 + 0.1 * jax.random.normal(k0, (split,), jnp.float32)
        beta = 0.1 * jax.random.normal(k1, (split,), jnp.float32)
        mean = 0.05 * jax.random.normal(k2, (split,), jnp.float32)
        var = 0.5 + 0.25 * jnp.abs(jax.random.normal(k3, (split,), jnp.float32))
        return (gamma, beta, mean, var)

    return {
        "w1": 0.1 * jax.random.normal(ks[0], (split, split), jnp.float32),
        "bn1": bn_params(ks[1], ks[2], ks[3], ks[4]),
        "dw": 0.1 * jax.random.normal(ks[5], (split, 1, 3, 3), jnp.float32),
        "bn2": bn_params(ks[6], ks[7], ks[8], ks[9]),
        "w3": 0.1 * jax.random.normal(ks[10], (split, split), jnp.float32),
        "bn3": bn_params(ks[11], ks[12], ks[13], ks[14]),
    }


if __name__ == "__main__":
    # BaseNode(inp=32, oup=32, stride=1)  ->  oup_inc = 16
    N, C, H, W = 2, 32, 16, 16
    key = jax.random.PRNGKey(0)
    kx, kp = jax.random.split(key)
    x = jax.random.normal(kx, (N, C, H, W), jnp.float32)
    params = make_params(kp, C // 2)

    y = jax.block_until_ready(basenode_forward(x, params))
    y_ref = jax.block_until_ready(basenode_reference(x, params))

    assert y.shape == (N, C, H, W)
    err = float(jnp.max(jnp.abs(y - y_ref)))
    # bf16 MXU operands (f32 accumulation) -> a few 1e-3 absolute error
    # against the all-f32 reference; 2e-2 gives a comfortable margin.
    assert jnp.allclose(y, y_ref, atol=2e-2, rtol=2e-2), err
    print("KERNEL_OK")
</pallas_src>

<mosaic_0001>
module attributes {stable_mosaic.version = 11 : i64} {
  func.func @kernel(%arg0: i32, %arg1: memref<1x32x256xf32, #tpu.memory_space<vmem>>, %arg2: memref<16x16xbf16, #tpu.memory_space<vmem>>, %arg3: memref<16x16xbf16, #tpu.memory_space<vmem>>, %arg4: memref<9x16x256xf32, #tpu.memory_space<vmem>>, %arg5: memref<16x3xf32, #tpu.memory_space<vmem>>, %arg6: memref<1x16x512xf32, #tpu.memory_space<vmem>>) attributes {dimension_semantics = [#tpu.dimension_semantics<parallel>], iteration_bounds = array<i64: 2>, scalar_prefetch = 0 : i64, scratch_operands = 0 : i64, tpu.core_type = #tpu.core_type<tc>, window_params = [{transform_indices = @transform_0, window_bounds = array<i64: 1, 32, 256>}, {pipeline_mode = #tpu.pipeline_mode<synchronous>, transform_indices = @transform_1, window_bounds = array<i64: 16, 16>}, {pipeline_mode = #tpu.pipeline_mode<synchronous>, transform_indices = @transform_2, window_bounds = array<i64: 16, 16>}, {pipeline_mode = #tpu.pipeline_mode<synchronous>, transform_indices = @transform_3, window_bounds = array<i64: 9, 16, 256>}, {pipeline_mode = #tpu.pipeline_mode<synchronous>, transform_indices = @transform_4, window_bounds = array<i64: 16, 3>}, {transform_indices = @transform_5, window_bounds = array<i64: 1, 16, 512>}]} {
    %c0 = arith.constant 0 : index
    %c0_0 = arith.constant 0 : index
    %0 = vector.load %arg2[%c0, %c0_0] : memref<16x16xbf16, #tpu.memory_space<vmem>>, vector<16x16xbf16>
    %c0_1 = arith.constant 0 : index
    %c0_2 = arith.constant 0 : index
    %1 = vector.load %arg3[%c0_1, %c0_2] : memref<16x16xbf16, #tpu.memory_space<vmem>>, vector<16x16xbf16>
    %c0_3 = arith.constant 0 : index
    %c0_4 = arith.constant 0 : index
    %2 = vector.load %arg5[%c0_3, %c0_4] : memref<16x3xf32, #tpu.memory_space<vmem>>, vector<16x3xf32>
    %3 = vector.extract_strided_slice %2 {offsets = [0, 0], sizes = [16, 1], strides = [1, 1]} : vector<16x3xf32> to vector<16x1xf32>
    %4 = vector.extract_strided_slice %2 {offsets = [0, 1], sizes = [16, 1], strides = [1, 1]} : vector<16x3xf32> to vector<16x1xf32>
    %5 = vector.extract_strided_slice %2 {offsets = [0, 2], sizes = [16, 1], strides = [1, 1]} : vector<16x3xf32> to vector<16x1xf32>
    %c0_5 = arith.constant 0 : index
    %c16 = arith.constant 16 : index
    %c0_6 = arith.constant 0 : index
    %6 = vector.load %arg1[%c0_5, %c16, %c0_6] : memref<1x32x256xf32, #tpu.memory_space<vmem>>, vector<1x16x256xf32>
    %7 = vector.shape_cast %6 : vector<1x16x256xf32> to vector<16x256xf32>
    %8 = arith.truncf %7 : vector<16x256xf32> to vector<16x256xbf16>
    %cst = arith.constant dense<0.000000e+00> : vector<16x256xf32>
    %9 = tpu.matmul %0, %8, %cst {dimension_numbers = #tpu.dot_dimension_numbers<[1], [0], [0], [1], [0, 0, 1, 1], [], []>} : vector<16x16xbf16>, vector<16x256xbf16>, vector<16x256xf32> -> vector<16x256xf32>
    %10 = vector.broadcast %3 : vector<16x1xf32> to vector<16x256xf32>
    %11 = arith.addf %9, %10 : vector<16x256xf32>
    %cst_7 = arith.constant 0.000000e+00 : f32
    %12 = vector.broadcast %cst_7 : f32 to vector<16x256xf32>
    %13 = arith.maximumf %11, %12 : vector<16x256xf32>
    %c4 = arith.constant 4 : index
    %c0_8 = arith.constant 0 : index
    %c0_9 = arith.constant 0 : index
    %14 = vector.load %arg4[%c4, %c0_8, %c0_9] : memref<9x16x256xf32, #tpu.memory_space<vmem>>, vector<1x16x256xf32>
    %15 = vector.shape_cast %14 : vector<1x16x256xf32> to vector<16x256xf32>
    %16 = arith.mulf %15, %13 : vector<16x256xf32>
    %c0_10 = arith.constant 0 : index
    %c0_11 = arith.constant 0 : index
    %c0_12 = arith.constant 0 : index
    %17 = vector.load %arg4[%c0_10, %c0_11, %c0_12] : memref<9x16x256xf32, #tpu.memory_space<vmem>>, vector<1x16x256xf32>
    %18 = vector.shape_cast %17 : vector<1x16x256xf32> to vector<16x256xf32>
    %c17_i32 = arith.constant 17 : i32
    %19 = tpu.dynamic_rotate %13 by %c17_i32 dim 1 : vector<16x256xf32>, i32 -> vector<16x256xf32>
    %20 = arith.mulf %18, %19 : vector<16x256xf32>
    %21 = arith.addf %16, %20 : vector<16x256xf32>
    %c1 = arith.constant 1 : index
    %c0_13 = arith.constant 0 : index
    %c0_14 = arith.constant 0 : index
    %22 = vector.load %arg4[%c1, %c0_13, %c0_14] : memref<9x16x256xf32, #tpu.memory_space<vmem>>, vector<1x16x256xf32>
    %23 = vector.shape_cast %22 : vector<1x16x256xf32> to vector<16x256xf32>
    %c16_i32 = arith.constant 16 : i32
    %24 = tpu.dynamic_rotate %13 by %c16_i32 dim 1 : vector<16x256xf32>, i32 -> vector<16x256xf32>
    %25 = arith.mulf %23, %24 : vector<16x256xf32>
    %26 = arith.addf %21, %25 : vector<16x256xf32>
    %c2 = arith.constant 2 : index
    %c0_15 = arith.constant 0 : index
    %c0_16 = arith.constant 0 : index
    %27 = vector.load %arg4[%c2, %c0_15, %c0_16] : memref<9x16x256xf32, #tpu.memory_space<vmem>>, vector<1x16x256xf32>
    %28 = vector.shape_cast %27 : vector<1x16x256xf32> to vector<16x256xf32>
    %c15_i32 = arith.constant 15 : i32
    %29 = tpu.dynamic_rotate %13 by %c15_i32 dim 1 : vector<16x256xf32>, i32 -> vector<16x256xf32>
    %30 = arith.mulf %28, %29 : vector<16x256xf32>
    %31 = arith.addf %26, %30 : vector<16x256xf32>
    %c3 = arith.constant 3 : index
    %c0_17 = arith.constant 0 : index
    %c0_18 = arith.constant 0 : index
    %32 = vector.load %arg4[%c3, %c0_17, %c0_18] : memref<9x16x256xf32, #tpu.memory_space<vmem>>, vector<1x16x256xf32>
    %33 = vector.shape_cast %32 : vector<1x16x256xf32> to vector<16x256xf32>
    %c1_i32 = arith.constant 1 : i32
    %34 = tpu.dynamic_rotate %13 by %c1_i32 dim 1 : vector<16x256xf32>, i32 -> vector<16x256xf32>
    %35 = arith.mulf %33, %34 : vector<16x256xf32>
    %36 = arith.addf %31, %35 : vector<16x256xf32>
    %c5 = arith.constant 5 : index
    %c0_19 = arith.constant 0 : index
    %c0_20 = arith.constant 0 : index
    %37 = vector.load %arg4[%c5, %c0_19, %c0_20] : memref<9x16x256xf32, #tpu.memory_space<vmem>>, vector<1x16x256xf32>
    %38 = vector.shape_cast %37 : vector<1x16x256xf32> to vector<16x256xf32>
    %c255_i32 = arith.constant 255 : i32
    %39 = tpu.dynamic_rotate %13 by %c255_i32 dim 1 : vector<16x256xf32>, i32 -> vector<16x256xf32>
    %40 = arith.mulf %38, %39 : vector<16x256xf32>
    %41 = arith.addf %36, %40 : vector<16x256xf32>
    %c6 = arith.constant 6 : index
    %c0_21 = arith.constant 0 : index
    %c0_22 = arith.constant 0 : index
    %42 = vector.load %arg4[%c6, %c0_21, %c0_22] : memref<9x16x256xf32, #tpu.memory_space<vmem>>, vector<1x16x256xf32>
    %43 = vector.shape_cast %42 : vector<1x16x256xf32> to vector<16x256xf32>
    %c241_i32 = arith.constant 241 : i32
    %44 = tpu.dynamic_rotate %13 by %c241_i32 dim 1 : vector<16x256xf32>, i32 -> vector<16x256xf32>
    %45 = arith.mulf %43, %44 : vector<16x256xf32>
    %46 = arith.addf %41, %45 : vector<16x256xf32>
    %c7 = arith.constant 7 : index
    %c0_23 = arith.constant 0 : index
    %c0_24 = arith.constant 0 : index
    %47 = vector.load %arg4[%c7, %c0_23, %c0_24] : memref<9x16x256xf32, #tpu.memory_space<vmem>>, vector<1x16x256xf32>
    %48 = vector.shape_cast %47 : vector<1x16x256xf32> to vector<16x256xf32>
    %c240_i32 = arith.constant 240 : i32
    %49 = tpu.dynamic_rotate %13 by %c240_i32 dim 1 : vector<16x256xf32>, i32 -> vector<16x256xf32>
    %50 = arith.mulf %48, %49 : vector<16x256xf32>
    %51 = arith.addf %46, %50 : vector<16x256xf32>
    %c8 = arith.constant 8 : index
    %c0_25 = arith.constant 0 : index
    %c0_26 = arith.constant 0 : index
    %52 = vector.load %arg4[%c8, %c0_25, %c0_26] : memref<9x16x256xf32, #tpu.memory_space<vmem>>, vector<1x16x256xf32>
    %53 = vector.shape_cast %52 : vector<1x16x256xf32> to vector<16x256xf32>
    %c239_i32 = arith.constant 239 : i32
    %54 = tpu.dynamic_rotate %13 by %c239_i32 dim 1 : vector<16x256xf32>, i32 -> vector<16x256xf32>
    %55 = arith.mulf %53, %54 : vector<16x256xf32>
    %56 = arith.addf %51, %55 : vector<16x256xf32>
    %57 = vector.broadcast %4 : vector<16x1xf32> to vector<16x256xf32>
    %58 = arith.addf %56, %57 : vector<16x256xf32>
    %59 = arith.truncf %58 : vector<16x256xf32> to vector<16x256xbf16>
    %cst_27 = arith.constant dense<0.000000e+00> : vector<16x256xf32>
    %60 = tpu.matmul %1, %59, %cst_27 {dimension_numbers = #tpu.dot_dimension_numbers<[1], [0], [0], [1], [0, 0, 1, 1], [], []>} : vector<16x16xbf16>, vector<16x256xbf16>, vector<16x256xf32> -> vector<16x256xf32>
    %61 = vector.broadcast %5 : vector<16x1xf32> to vector<16x256xf32>
    %62 = arith.addf %60, %61 : vector<16x256xf32>
    %cst_28 = arith.constant 0.000000e+00 : f32
    %63 = vector.broadcast %cst_28 : f32 to vector<16x256xf32>
    %64 = arith.maximumf %62, %63 : vector<16x256xf32>
    %c0_29 = arith.constant 0 : index
    %c0_30 = arith.constant 0 : index
    %c0_31 = arith.constant 0 : index
    %65 = vector.load %arg1[%c0_29, %c0_30, %c0_31] : memref<1x32x256xf32, #tpu.memory_space<vmem>>, vector<1x16x256xf32>
    %66 = vector.shape_cast %65 : vector<1x16x256xf32> to vector<16x256xf32>
    %c0_32 = arith.constant 0 : index
    %c0_33 = arith.constant 0 : index
    %c0_34 = arith.constant 0 : index
    %67 = vector.load %arg6[%c0_32, %c0_33, %c0_34] : memref<1x16x512xf32, #tpu.memory_space<vmem>>, vector<1x16x256xf32>
    %68 = vector.shape_cast %67 : vector<1x16x256xf32> to vector<16x256xf32>
    %69 = vector.shape_cast %66 : vector<16x256xf32> to vector<1x16x256xf32>
    tpu.vector_store %arg6[%c0_32, %c0_33, %c0_34], %69 {strides = array<i32>} : memref<1x16x512xf32, #tpu.memory_space<vmem>>, vector<1x16x256xf32>,
    %c0_35 = arith.constant 0 : index
    %c0_36 = arith.constant 0 : index
    %c256 = arith.constant 256 : index
    %70 = vector.load %arg6[%c0_35, %c0_36, %c256] : memref<1x16x512xf32, #tpu.memory_space<vmem>>, vector<1x16x256xf32>
    %71 = vector.shape_cast %70 : vector<1x16x256xf32> to vector<16x256xf32>
    %72 = vector.shape_cast %64 : vector<16x256xf32> to vector<1x16x256xf32>
    tpu.vector_store %arg6[%c0_35, %c0_36, %c256], %72 {strides = array<i32>} : memref<1x16x512xf32, #tpu.memory_space<vmem>>, vector<1x16x256xf32>,
    return
  }
  func.func @transform_0(%arg0: i32) -> (i32, i32, i32) {
    %c0_i32 = arith.constant 0 : i32
    %c0_i32_0 = arith.constant 0 : i32
    %c0_i32_1 = arith.constant 0 : i32
    return %arg0, %c0_i32, %c0_i32_0 : i32, i32, i32
  }
  func.func @transform_1(%arg0: i32) -> (i32, i32) {
    %c0_i32 = arith.constant 0 : i32
    %c0_i32_0 = arith.constant 0 : i32
    %c0_i32_1 = arith.constant 0 : i32
    return %c0_i32, %c0_i32_0 : i32, i32
  }
  func.func @transform_2(%arg0: i32) -> (i32, i32) {
    %c0_i32 = arith.constant 0 : i32
    %c0_i32_0 = arith.constant 0 : i32
    %c0_i32_1 = arith.constant 0 : i32
    return %c0_i32, %c0_i32_0 : i32, i32
  }
  func.func @transform_3(%arg0: i32) -> (i32, i32, i32) {
    %c0_i32 = arith.constant 0 : i32
    %c0_i32_0 = arith.constant 0 : i32
    %c0_i32_1 = arith.constant 0 : i32
    %c0_i32_2 = arith.constant 0 : i32
    return %c0_i32, %c0_i32_0, %c0_i32_1 : i32, i32, i32
  }
  func.func @transform_4(%arg0: i32) -> (i32, i32) {
    %c0_i32 = arith.constant 0 : i32
    %c0_i32_0 = arith.constant 0 : i32
    %c0_i32_1 = arith.constant 0 : i32
    return %c0_i32, %c0_i32_0 : i32, i32
  }
  func.func @transform_5(%arg0: i32) -> (i32, i32, i32) {
    %c0_i32 = arith.constant 0 : i32
    %c0_i32_0 = arith.constant 0 : i32
    %c0_i32_1 = arith.constant 0 : i32
    return %arg0, %c0_i32, %c0_i32_0 : i32, i32, i32
  }
}

</mosaic_0001>

<llo_original>
// kernel: tpu_custom_call.1
$region0: #{tpu_custom_call.1}
  #allocation0 [shape = 'u32[]', space=smem, size = 0x4, offset = 0x4, fixed_abs, tag = 'smem constant byte address 0x4 - core index']
  #allocation1 [shape = 'u32[144,128]{1,0:T(1,128)}', space=vmem, size = 0x12000, scoped, tag = 'internal scratch']
  %s0 = inlined_call_operand.hbm [shape: f32[2,32,256], index: 0, kind: input, shape index: {}]
  %s1 = inlined_call_operand.vmem [shape: bf16[16,16], index: 1, kind: input, shape index: {}]
  %s2 = inlined_call_operand.vmem [shape: bf16[16,16], index: 2, kind: input, shape index: {}]
  %s3 = inlined_call_operand.hbm [shape: f32[9,16,256], index: 3, kind: input, shape index: {}]
  %s4 = inlined_call_operand.vmem [shape: f32[16,3], index: 4, kind: input, shape index: {}]
  %s5 = inlined_call_operand.hbm [shape: f32[2,16,512], index: 5, kind: output, shape index: {}]
  %s6 = sld [smem:[#allocation0]]
  $region61: #{tpu_custom_call.1} parent=0
    _
  %s8 = ssub.s32 1, %s6
  %s9 = scalar_select 0, %s8, %s6
  $region1: #{tpu_custom_call.1} parent=0
    #allocation2 [shape = 'u8[65536]{0}', space=vmem, size = 0x10000, scoped, tag = 'input window, operand 0']
    #allocation3 [shape = 's32[2]{0}', space=sflag, size = 0x8, scoped, tag = 'scoped memory for tpu_custom_call.1']
    #allocation4 [shape = 's32[2]{0}', space=sflag, size = 0x8, scoped, tag = 'scoped memory for tpu_custom_call.1']
    #allocation5 [shape = 'u8[147456]{0}', space=vmem, size = 0x24000, scoped, tag = 'input window, operand 3, single buffered']
    #allocation6 [shape = 's32[1]{0}', space=sflag, size = 0x4, scoped, tag = 'scoped memory for tpu_custom_call.1']
    #allocation7 [shape = 'u8[65536]{0}', space=vmem, size = 0x10000, scoped, tag = 'output window, operand 0']
    %10 = vsyncpa [#allocation3], 0
    %s11 = scalar_lea.sflag [#allocation3], 1
    %12 = vsyncpa %s11, 0
    %13 = vsyncpa [#allocation6], 0
    %14 = vsyncpa [#allocation4], 0
    %s15 = scalar_lea.sflag [#allocation4], 1
    %16 = vsyncpa %s15, 0
    loop: start=0, step=1, limit=4
    $region2: #{tpu_custom_call.1} parent=1 // loop_pre_header
      _
    $region3: #{tpu_custom_call.1} parent=1 // loop_header
      %s18 = sphi 0, %s22
      %p19 = scmp.ge.s32.totalorder %s18, 4
      %s28 = sphi 0, %s30
      %s31 = sphi 0, %s28
      %s32 = sphi 0, %s31
      %s48 = sphi 0, %s32
      %s52 = sphi 0, %s52
      %s54 = sphi 0, %s52
      %s55 = sphi 0, %s54
      %s69 = sphi 0, %s55
      %s73 = sphi 0, %s73
      %s75 = sphi 0, %s73
      %s76 = sphi 0, %s75
      %s90 = sphi 0, %s76
      %s94 = sphi 0, %s94
      %s96 = sphi 0, %s94
      %s97 = sphi 0, %s96
      %s111 = sphi 0, %s97
      %s115 = sphi 0, %s115
      %s117 = sphi 0, %s115
      %s118 = sphi 0, %s117
      %s132 = sphi 0, %s118
      %s138 = sphi 0, %s140
      %s141 = sphi 0, %s138
      %s142 = sphi 0, %s141
      %s158 = sphi 0, %s142
    $region4: #{tpu_custom_call.1} parent=1 // loop_header_branch
      %21 = sbr.rel (%p19) target = $region8
    $region5: #{tpu_custom_call.1} parent=1 // loop_body
      %s23 = ssub.s32 %s18, 1
      %s24 = ssub.s32 %s18, 2
      %s25 = sadd.s32 %s18, 1
      %s26 = ssub.s32 %s18, %s25
      %p27 = scmp.eq.s32.totalorder %s26, 0
      %s29 = sadd.s32 %s28, 1
      %s30 = scalar_select %p27, %s28, %s29
      %p33 = pneg %p27
      %p34 = scmp.eq.s32.totalorder %s18, 1
      %p35 = por %p33, %p34
      %p36 = scmp.ne.s32.totalorder %s28, %s31
      %p37 = scmp.eq.s32.totalorder %s18, 0
      %p38 = por %p36, %p37
      %p39 = scmp.ne.s32.totalorder %s28, %s31
      %p40 = scmp.eq.s32.totalorder %s23, 1
      %p41 = por %p39, %p40
      %p42 = scmp.ne.s32.totalorder %s31, %s32
      %p43 = scmp.eq.s32.totalorder %s23, 0
      %p44 = por %p42, %p43
      %p45 = scmp.ne.s32.totalorder %s31, %s32
      %p46 = scmp.eq.s32.totalorder %s24, 1
      %p47 = por %p45, %p46
      %p49 = scmp.ne.s32.totalorder %s32, %s48
      %p50 = scmp.eq.s32.totalorder %s24, 0
      %p51 = por %p49, %p50
      %s53 = sadd.s32 %s52, 1
      %p56 = scmp.eq.s32.totalorder %s18, 1
      %p57 = scmp.ne.s32.totalorder %s52, %s54
      %p58 = scmp.eq.s32.totalorder %s18, 0
      %p59 = por %p57, %p58
      %p60 = scmp.ne.s32.totalorder %s52, %s54
      %p61 = scmp.eq.s32.totalorder %s23, 1
      %p62 = por %p60, %p61
      %p63 = scmp.ne.s32.totalorder %s54, %s55
      %p64 = scmp.eq.s32.totalorder %s23, 0
      %p65 = por %p63, %p64
      %p66 = scmp.ne.s32.totalorder %s54, %s55
      %p67 = scmp.eq.s32.totalorder %s24, 1
      %p68 = por %p66, %p67
      %p70 = scmp.ne.s32.totalorder %s55, %s69
      %p71 = scmp.eq.s32.totalorder %s24, 0
      %p72 = por %p70, %p71
      %s74 = sadd.s32 %s73, 1
      %p77 = scmp.eq.s32.totalorder %s18, 1
      %p78 = scmp.ne.s32.totalorder %s73, %s75
      %p79 = scmp.eq.s32.totalorder %s18, 0
      %p80 = por %p78, %p79
      %p81 = scmp.ne.s32.totalorder %s73, %s75
      %p82 = scmp.eq.s32.totalorder %s23, 1
      %p83 = por %p81, %p82
      %p84 = scmp.ne.s32.totalorder %s75, %s76
      %p85 = scmp.eq.s32.totalorder %s23, 0
      %p86 = por %p84, %p85
      %p87 = scmp.ne.s32.totalorder %s75, %s76
      %p88 = scmp.eq.s32.totalorder %s24, 1
      %p89 = por %p87, %p88
      %p91 = scmp.ne.s32.totalorder %s76, %s90
      %p92 = scmp.eq.s32.totalorder %s24, 0
      %p93 = por %p91, %p92
      %s95 = sadd.s32 %s94, 1
      %p98 = scmp.eq.s32.totalorder %s18, 1
      %p99 = scmp.ne.s32.totalorder %s94, %s96
      %p100 = scmp.eq.s32.totalorder %s18, 0
      %p101 = por %p99, %p100
      %p102 = scmp.ne.s32.totalorder %s94, %s96
      %p103 = scmp.eq.s32.totalorder %s23, 1
      %p104 = por %p102, %p103
      %p105 = scmp.ne.s32.totalorder %s96, %s97
      %p106 = scmp.eq.s32.totalorder %s23, 0
      %p107 = por %p105, %p106
      %p108 = scmp.ne.s32.totalorder %s96, %s97
      %p109 = scmp.eq.s32.totalorder %s24, 1
      %p110 = por %p108, %p109
      %p112 = scmp.ne.s32.totalorder %s97, %s111
      %p113 = scmp.eq.s32.totalorder %s24, 0
      %p114 = por %p112, %p113
      %s116 = sadd.s32 %s115, 1
      %p119 = scmp.eq.s32.totalorder %s18, 1
      %p120 = scmp.ne.s32.totalorder %s115, %s117
      %p121 = scmp.eq.s32.totalorder %s18, 0
      %p122 = por %p120, %p121
      %p123 = scmp.ne.s32.totalorder %s115, %s117
      %p124 = scmp.eq.s32.totalorder %s23, 1
      %p125 = por %p123, %p124
      %p126 = scmp.ne.s32.totalorder %s117, %s118
      %p127 = scmp.eq.s32.totalorder %s23, 0
      %p128 = por %p126, %p127
      %p129 = scmp.ne.s32.totalorder %s117, %s118
      %p130 = scmp.eq.s32.totalorder %s24, 1
      %p131 = por %p129, %p130
      %p133 = scmp.ne.s32.totalorder %s118, %s132
      %p134 = scmp.eq.s32.totalorder %s24, 0
      %p135 = por %p133, %p134
      %s136 = ssub.s32 %s18, %s25
      %p137 = scmp.eq.s32.totalorder %s136, 0
      %s139 = sadd.s32 %s138, 1
      %s140 = scalar_select %p137, %s138, %s139
      %p143 = pneg %p137
      %p144 = scmp.eq.s32.totalorder %s18, 1
      %p145 = por %p143, %p144
      %p146 = scmp.ne.s32.totalorder %s138, %s141
      %p147 = scmp.eq.s32.totalorder %s18, 0
      %p148 = por %p146, %p147
      %p149 = scmp.ne.s32.totalorder %s138, %s141
      %p150 = scmp.eq.s32.totalorder %s23, 1
      %p151 = por %p149, %p150
      %p152 = scmp.ne.s32.totalorder %s141, %s142
      %p153 = scmp.eq.s32.totalorder %s23, 0
      %p154 = por %p152, %p153
      %p155 = scmp.ne.s32.totalorder %s141, %s142
      %p156 = scmp.eq.s32.totalorder %s24, 1
      %p157 = por %p155, %p156
      %p159 = scmp.ne.s32.totalorder %s142, %s158
      %p160 = scmp.eq.s32.totalorder %s24, 0
      %p161 = por %p159, %p160
      %p162 = scmp.le.s32.totalorder 1, %s18
      %p163 = scmp.lt.s32.totalorder %s18, 3
      %p164 = pnand %p162, %p163
      %p165 = pneg %p164
      // Predicated region
      $region9: #{tpu_custom_call.1} parent=5 // pred_check
        _
      $region10: #{tpu_custom_call.1} parent=5 // pred_check_branch
        %167 = sbr.rel (%p164) target = $region12
      $region11: #{tpu_custom_call.1} parent=5 // pred_region
        %s168 = ssub.s32 %s18, 1
        // Predicated region
        $region13: #{tpu_custom_call.1} parent=11 // pred_check
          %p169 = pneg %p65
        $region14: #{tpu_custom_call.1} parent=11 // pred_check_branch
          %171 = sbr.rel (%p169) target = $region16
        $region15: #{tpu_custom_call.1} parent=11 // pred_region
          _
        $region16: #{tpu_custom_call.1} parent=11 // pred_fallthru
          _
        // Predicated region
        $region17: #{tpu_custom_call.1} parent=11 // pred_check
          %p172 = pneg %p86
        $region18: #{tpu_custom_call.1} parent=11 // pred_check_branch
          %174 = sbr.rel (%p172) target = $region20
        $region19: #{tpu_custom_call.1} parent=11 // pred_region
          _
        $region20: #{tpu_custom_call.1} parent=11 // pred_fallthru
          _
        // Predicated region
        $region21: #{tpu_custom_call.1} parent=11 // pred_check
          %p175 = pneg %p107
        $region22: #{tpu_custom_call.1} parent=11 // pred_check_branch
          %177 = sbr.rel (%p175) target = $region24
        $region23: #{tpu_custom_call.1} parent=11 // pred_region
          %s179 = ssub.s32 4608, 4608
          %180 = vsyncadd [#allocation6], %s179
          %s181 = sshll.u32 [#allocation5], 4
          %s182 = int_to_ptr.vmem [resolvable:$true] %s181
          %187 = dma.hbm_to_vmem [thread:$0]  %s3, 4608, %s182, [#allocation6], 256, 256, 16
        $region24: #{tpu_custom_call.1} parent=11 // pred_fallthru
          _
        // Predicated region
        $region25: #{tpu_custom_call.1} parent=11 // pred_check
          %p188 = pneg %p128
        $region26: #{tpu_custom_call.1} parent=11 // pred_check_branch
          %190 = sbr.rel (%p188) target = $region28
        $region27: #{tpu_custom_call.1} parent=11 // pred_region
          _
        $region28: #{tpu_custom_call.1} parent=11 // pred_fallthru
          _
      $region12: #{tpu_custom_call.1} parent=5 // pred_fallthru
        _
      %p191 = scmp.lt.s32.totalorder %s18, 2
      // Predicated region
      $region29: #{tpu_custom_call.1} parent=5 // pred_check
        %p192 = pneg %p191
      $region30: #{tpu_custom_call.1} parent=5 // pred_check_branch
        %194 = sbr.rel (%p192) target = $region32
      $region31: #{tpu_custom_call.1} parent=5 // pred_region
        // Predicated region
        $region33: #{tpu_custom_call.1} parent=31 // pred_check
          %p195 = pneg %p38
        $region34: #{tpu_custom_call.1} parent=31 // pred_check_branch
          %197 = sbr.rel (%p195) target = $region36
        $region35: #{tpu_custom_call.1} parent=31 // pred_region
          %s198 = sand.u32 %s28, 1
          %s199 = scalar_lea.sflag [#allocation3], %s198
          %s200 = sand.u32 %s28, 1
          %s201 = smul.addr %s200, 64
          %s202 = scalar_lea.vmem [#allocation2], %s201
          %s204 = ssub.s32 1024, 1024
          %205 = vsyncadd %s199, %s204
          %s206 = smul.addr %s18, 8
          %s207 = smul.addr %s206, 128
          %s208 = scalar_lea.hbm %s0, %s207
          %s209 = sshll.u32 %s202, 4
          %s210 = int_to_ptr.vmem [resolvable:$true] %s209
          %215 = dma.hbm_to_vmem [thread:$0]  %s208, 1024, %s210, %s199, 256, 256, 16
        $region36: #{tpu_custom_call.1} parent=31 // pred_fallthru
          _
      $region32: #{tpu_custom_call.1} parent=5 // pred_fallthru
        _
      %p216 = scmp.le.s32.totalorder 1, %s18
      %p217 = scmp.lt.s32.totalorder %s18, 3
      %p218 = pnand %p216, %p217
      %p219 = pneg %p218
      // Predicated region
      $region37: #{tpu_custom_call.1} parent=5 // pred_check
        _
      $region38: #{tpu_custom_call.1} parent=5 // pred_check_branch
        %221 = sbr.rel (%p218) target = $region40
      $region39: #{tpu_custom_call.1} parent=5 // pred_region
        %s222 = ssub.s32 %s18, 1
        %s223 = sand.u32 %s31, 1
        %s224 = scalar_lea.sflag [#allocation3], %s223
        %s225 = sand.u32 %s31, 1
        %s226 = smul.addr %s225, 64
        %s227 = scalar_lea.vmem [#allocation2], %s226
        // Predicated region
        $region41: #{tpu_custom_call.1} parent=39 // pred_check
          %p228 = pneg %p44
        $region42: #{tpu_custom_call.1} parent=39 // pred_check_branch
          %230 = sbr.rel (%p228) target = $region44
        $region43: #{tpu_custom_call.1} parent=39 // pred_region
          %231 = dma.done %s224, 1024
        $region44: #{tpu_custom_call.1} parent=39 // pred_fallthru
          _
        // Predicated region
        $region45: #{tpu_custom_call.1} parent=39 // pred_check
          %p232 = pneg %p107
        $region46: #{tpu_custom_call.1} parent=39 // pred_check_branch
          %234 = sbr.rel (%p232) target = $region48
        $region47: #{tpu_custom_call.1} parent=39 // pred_region
          %235 = dma.done [#allocation6], 4608
        $region48: #{tpu_custom_call.1} parent=39 // pred_fallthru
          _
        %s236 = sand.u32 %s31, 1
        %s237 = scalar_lea.sflag [#allocation3], %s236
        %s238 = sand.u32 %s31, 1
        %s239 = smul.addr %s238, 64
        %s240 = scalar_lea.vmem [#allocation2], %s239
        %p241 = pneg %p44
        %p242 = pneg %p41
        %p243 = pneg %p65
        %p244 = pneg %p62
        %p245 = pneg %p86
        %p246 = pneg %p83
        %p247 = pneg %p107
        %p248 = pneg %p104
        %p249 = pneg %p128
        %p250 = pneg %p125
        %p251 = pneg %p154
        %p252 = pneg %p151
        %s253 = sand.u32 %s141, 1
        %s254 = scalar_lea.sflag [#allocation4], %s253
        %s255 = sand.u32 %s141, 1
        %s256 = smul.addr %s255, 64
        %s257 = scalar_lea.vmem [#allocation7], %s256
        %v259 = vld [vmem:[%s1] sm:$0xf]
        %v260 = vld [vmem:[%s1 + $0x4] sm:$0xf]
        %v261 = vld [vmem:[%s2] sm:$0xf]
        %v262 = vld [vmem:[%s2 + $0x4] sm:$0xf]
        %v263 = vld [vmem:[%s4] sm:$0xff]
        %v264 = vld [vmem:[%s4 + $0x8] sm:$0xff]
        %v265 = vld [vmem:[%s227 + $0x20] sm:$0xff]
        %v266 = vld [vmem:[%s227 + $0x28] sm:$0xff]
        %v267 = vld [vmem:[%s227 + $0x30] sm:$0xff]
        %v268 = vld [vmem:[%s227 + $0x38] sm:$0xff]
        %v269 = vpack.c.bf16 %v267, %v265
        %v270 = vpack.c.bf16 %v268, %v266
        %272 = vset.pattern.permute.xlu0 0
        %273 = vperm.xlu0 %272, %v263
        %v274 = vpop.permute.xlu0 %273
        %277 = vset.pattern.permute.xlu0 0
        %278 = vperm.xlu0 %277, %v264
        %v279 = vpop.permute.xlu0 %278
        %v283 = vunpack.c.l.b16 %v259
        %v284 = vunpack.c.l.b16 %v260
        %v285 = vpack.c.b16 %v284, %v283
        %vm286 = vcmask 130048
        %v288 = vsel %vm286, %v285, 0
        %290 = vmatprep.subr.bf16.mxu0 0
        %291 = vmatpush1.bf16.msra.mxu0 0
        %292 = vmatprep.subr.bf16.mxu0 0
        %293 = vmatpush1.bf16.msra.mxu0 0
        %294 = vmatprep.subr.bf16.mxu0 0
        %295 = vmatpush1.bf16.msra.mxu0 0
        %296 = vmatprep.subr.bf16.mxu0 0
        %297 = vmatpush1.bf16.msra.mxu0 0
        %298 = vmatprep.subr.bf16.mxu0 0
        %299 = vmatpush1.bf16.msra.mxu0 0
        %300 = vmatprep.subr.bf16.mxu0 0
        %301 = vmatpush1.bf16.msra.mxu0 0
        %302 = vmatprep.subr.bf16.mxu0 0
        %303 = vmatpush1.bf16.msra.mxu0 0
        %304 = vmatprep.subr.bf16.mxu0 %v270
        %305 = vmatpush1.bf16.msra.mxu0 %v269
        %306 = vmatprep.subr.bf16.mxu0 0
        %307 = vmatpush2.bf16.msra.mxu0 0
        %308 = vmatprep.subr.bf16.mxu0 0
        %309 = vmatpush2.bf16.msra.mxu0 0
        %310 = vmatprep.subr.bf16.mxu0 0
        %311 = vmatpush2.bf16.msra.mxu0 0
        %312 = vmatprep.subr.bf16.mxu0 0
        %313 = vmatpush2.bf16.msra.mxu0 0
        %314 = vmatprep.subr.bf16.mxu0 0
        %315 = vmatpush2.bf16.msra.mxu0 0
        %316 = vmatprep.subr.bf16.mxu0 0
        %317 = vmatpush2.bf16.msra.mxu0 0
        %318 = vmatprep.subr.bf16.mxu0 0
        %319 = vmatpush2.bf16.msra.mxu0 0
        %320 = vmatprep.subr.bf16.mxu0 0
        %321 = vmatpush2.bf16.msra.mxu0 0
        %322 = vmatprep.mubr.bf16.mxu0 0
        %323 = vmatmul.mubr.bf16.gmra.mxu0 %v288
        %v324 = vpop.f32.mrf.mxu0
        %v325 = vadd.f32 %v274, %v324
        %v326 = vpop.f32.mrf.mxu0
        %v327 = vadd.f32 %v274, %v326
        %v328 = vpop.f32.mrf.mxu0
        %v329 = vadd.f32 %v279, %v328
        %v330 = vpop.f32.mrf.mxu0
        %v331 = vadd.f32 %v279, %v330
        %332 = vdwg.mxu0
        %v333 = vmax.f32 %v325, 0.0
        %v334 = vmax.f32 %v327, 0.0
        %v335 = vmax.f32 %v329, 0.0
        %v336 = vmax.f32 %v331, 0.0
        %s337 = scalar_lea.vmem [#allocation5], 128
        %v338 = vld [vmem:[%s337] sm:$0xff]
        %v339 = vld [vmem:[%s337 + $0x8] sm:$0xff]
        %v340 = vld [vmem:[%s337 + $0x10] sm:$0xff]
        %v341 = vld [vmem:[%s337 + $0x18] sm:$0xff]
        %v342 = vmul.f32 %v338, %v333
        %v343 = vmul.f32 %v339, %v334
        %v344 = vmul.f32 %v340, %v335
        %v345 = vmul.f32 %v341, %v336
        %v346 = vld [vmem:[#allocation5] sm:$0xff]
        %v347 = vld [vmem:[#allocation5 + $0x8] sm:$0xff]
        %v348 = vld [vmem:[#allocation5 + $0x10] sm:$0xff]
        %v349 = vld [vmem:[#allocation5 + $0x18] sm:$0xff]
        %350 = vrot.lane.b32.xlu0 %v333, 17
        %v351 = vpop.permute.xlu0 %350
        %352 = vrot.lane.b32.xlu0 %v335, 17
        %v353 = vpop.permute.xlu0 %352
        %354 = vrot.lane.b32.xlu0 %v334, 17
        %v355 = vpop.permute.xlu0 %354
        %356 = vrot.lane.b32.xlu0 %v336, 17
        %v357 = vpop.permute.xlu0 %356
        %v358 = vlaneseq
        %v359 = vand.u32 %v358, 127
        %vm360 = vcmp.lt.s32.totalorder %v359, 17
        %v361 = vsel %vm360, %v351, %v355
        %v362 = vsel %vm360, %v353, %v357
        %v363 = vsel %vm360, %v355, %v351
        %v364 = vsel %vm360, %v357, %v353
        %v365 = vmul.f32 %v346, %v363
        %v366 = vmul.f32 %v347, %v361
        %v367 = vmul.f32 %v348, %v364
        %v368 = vmul.f32 %v349, %v362
        %v369 = vadd.f32 %v342, %v365
        %v370 = vadd.f32 %v343, %v366
        %v371 = vadd.f32 %v344, %v367
        %v372 = vadd.f32 %v345, %v368
        %s373 = scalar_lea.vmem [#allocation5], 32
        %v374 = vld [vmem:[%s373] sm:$0xff]
        %v375 = vld [vmem:[%s373 + $0x8] sm:$0xff]
        %v376 = vld [vmem:[%s373 + $0x10] sm:$0xff]
        %v377 = vld [vmem:[%s373 + $0x18] sm:$0xff]
        %378 = vrot.lane.b32.xlu0 %v333, 16
        %v379 = vpop.permute.xlu0 %378
        %380 = vrot.lane.b32.xlu0 %v335, 16
        %v381 = vpop.permute.xlu0 %380
        %382 = vrot.lane.b32.xlu0 %v334, 16
        %v383 = vpop.permute.xlu0 %382
        %384 = vrot.lane.b32.xlu0 %v336, 16
        %v385 = vpop.permute.xlu0 %384
        %vm386 = vcmp.lt.s32.totalorder %v359, 16
        %v387 = vsel %vm386, %v379, %v383
        %v388 = vsel %vm386, %v381, %v385
        %v389 = vsel %vm386, %v383, %v379
        %v390 = vsel %vm386, %v385, %v381
        %v391 = vmul.f32 %v374, %v389
        %v392 = vmul.f32 %v375, %v387
        %v393 = vmul.f32 %v376, %v390
        %v394 = vmul.f32 %v377, %v388
        %v395 = vadd.f32 %v369, %v391
        %v396 = vadd.f32 %v370, %v392
        %v397 = vadd.f32 %v371, %v393
        %v398 = vadd.f32 %v372, %v394
        %s399 = scalar_lea.vmem [#allocation5], 64
        %v400 = vld [vmem:[%s399] sm:$0xff]
        %v401 = vld [vmem:[%s399 + $0x8] sm:$0xff]
        %v402 = vld [vmem:[%s399 + $0x10] sm:$0xff]
        %v403 = vld [vmem:[%s399 + $0x18] sm:$0xff]
        %404 = vrot.lane.b32.xlu0 %v333, 15
        %v405 = vpop.permute.xlu0 %404
        %406 = vrot.lane.b32.xlu0 %v335, 15
        %v407 = vpop.permute.xlu0 %406
        %408 = vrot.lane.b32.xlu0 %v334, 15
        %v409 = vpop.permute.xlu0 %408
        %410 = vrot.lane.b32.xlu0 %v336, 15
        %v411 = vpop.permute.xlu0 %410
        %vm412 = vcmp.lt.s32.totalorder %v359, 15
        %v413 = vsel %vm412, %v405, %v409
        %v414 = vsel %vm412, %v407, %v411
        %v415 = vsel %vm412, %v409, %v405
        %v416 = vsel %vm412, %v411, %v407
        %v417 = vmul.f32 %v400, %v415
        %v418 = vmul.f32 %v401, %v413
        %v419 = vmul.f32 %v402, %v416
        %v420 = vmul.f32 %v403, %v414
        %v421 = vadd.f32 %v395, %v417
        %v422 = vadd.f32 %v396, %v418
        %v423 = vadd.f32 %v397, %v419
        %v424 = vadd.f32 %v398, %v420
        %s425 = scalar_lea.vmem [#allocation5], 96
        %v426 = vld [vmem:[%s425] sm:$0xff]
        %v427 = vld [vmem:[%s425 + $0x8] sm:$0xff]
        %v428 = vld [vmem:[%s425 + $0x10] sm:$0xff]
        %v429 = vld [vmem:[%s425 + $0x18] sm:$0xff]
        %430 = vrot.lane.b32.xlu0 %v333, 1
        %v431 = vpop.permute.xlu0 %430
        %432 = vrot.lane.b32.xlu0 %v335, 1
        %v433 = vpop.permute.xlu0 %432
        %434 = vrot.lane.b32.xlu0 %v334, 1
        %v435 = vpop.permute.xlu0 %434
        %436 = vrot.lane.b32.xlu0 %v336, 1
        %v437 = vpop.permute.xlu0 %436
        %vm438 = vcmp.lt.s32.totalorder %v359, 1
        %v439 = vsel %vm438, %v431, %v435
        %v440 = vsel %vm438, %v433, %v437
        %v441 = vsel %vm438, %v435, %v431
        %v442 = vsel %vm438, %v437, %v433
        %v443 = vmul.f32 %v426, %v441
        %v444 = vmul.f32 %v427, %v439
        %v445 = vmul.f32 %v428, %v442
        %v446 = vmul.f32 %v429, %v440
        %v447 = vadd.f32 %v421, %v443
        %v448 = vadd.f32 %v422, %v444
        %v449 = vadd.f32 %v423, %v445
        %v450 = vadd.f32 %v424, %v446
        %s451 = scalar_lea.vmem [#allocation5], 160
        %v452 = vld [vmem:[%s451] sm:$0xff]
        %v453 = vld [vmem:[%s451 + $0x8] sm:$0xff]
        %v454 = vld [vmem:[%s451 + $0x10] sm:$0xff]
        %v455 = vld [vmem:[%s451 + $0x18] sm:$0xff]
        %456 = vrot.lane.b32.xlu0 %v333, 127
        %v457 = vpop.permute.xlu0 %456
        %458 = vrot.lane.b32.xlu0 %v335, 127
        %v459 = vpop.permute.xlu0 %458
        %460 = vrot.lane.b32.xlu0 %v334, 127
        %v461 = vpop.permute.xlu0 %460
        %462 = vrot.lane.b32.xlu0 %v336, 127
        %v463 = vpop.permute.xlu0 %462
        %vm464 = vcmp.lt.s32.totalorder %v359, 127
        %v465 = vsel %vm464, %v457, %v461
        %v466 = vsel %vm464, %v459, %v463
        %v467 = vsel %vm464, %v461, %v457
        %v468 = vsel %vm464, %v463, %v459
        %v469 = vmul.f32 %v452, %v465
        %v470 = vmul.f32 %v453, %v467
        %v471 = vmul.f32 %v454, %v466
        %v472 = vmul.f32 %v455, %v468
        %v473 = vadd.f32 %v447, %v469
        %v474 = vadd.f32 %v448, %v470
        %v475 = vadd.f32 %v449, %v471
        %v476 = vadd.f32 %v450, %v472
        %s477 = scalar_lea.vmem [#allocation5], 192
        %v478 = vld [vmem:[%s477] sm:$0xff]
        %v479 = vld [vmem:[%s477 + $0x8] sm:$0xff]
        %v480 = vld [vmem:[%s477 + $0x10] sm:$0xff]
        %v481 = vld [vmem:[%s477 + $0x18] sm:$0xff]
        %482 = vrot.lane.b32.xlu0 %v333, 113
        %v483 = vpop.permute.xlu0 %482
        %484 = vrot.lane.b32.xlu0 %v335, 113
        %v485 = vpop.permute.xlu0 %484
        %486 = vrot.lane.b32.xlu0 %v334, 113
        %v487 = vpop.permute.xlu0 %486
        %488 = vrot.lane.b32.xlu0 %v336, 113
        %v489 = vpop.permute.xlu0 %488
        %vm490 = vcmp.lt.s32.totalorder %v359, 113
        %v491 = vsel %vm490, %v483, %v487
        %v492 = vsel %vm490, %v485, %v489
        %v493 = vsel %vm490, %v487, %v483
        %v494 = vsel %vm490, %v489, %v485
        %v495 = vmul.f32 %v478, %v491
        %v496 = vmul.f32 %v479, %v493
        %v497 = vmul.f32 %v480, %v492
        %v498 = vmul.f32 %v481, %v494
        %v499 = vadd.f32 %v473, %v495
        %v500 = vadd.f32 %v474, %v496
        %v501 = vadd.f32 %v475, %v497
        %v502 = vadd.f32 %v476, %v498
        %s503 = scalar_lea.vmem [#allocation5], 224
        %v504 = vld [vmem:[%s503] sm:$0xff]
        %v505 = vld [vmem:[%s503 + $0x8] sm:$0xff]
        %v506 = vld [vmem:[%s503 + $0x10] sm:$0xff]
        %v507 = vld [vmem:[%s503 + $0x18] sm:$0xff]
        %508 = vrot.lane.b32.xlu0 %v333, 112
        %v509 = vpop.permute.xlu0 %508
        %510 = vrot.lane.b32.xlu0 %v335, 112
        %v511 = vpop.permute.xlu0 %510
        %512 = vrot.lane.b32.xlu0 %v334, 112
        %v513 = vpop.permute.xlu0 %512
        %514 = vrot.lane.b32.xlu0 %v336, 112
        %v515 = vpop.permute.xlu0 %514
        %vm516 = vcmp.lt.s32.totalorder %v359, 112
        %v517 = vsel %vm516, %v509, %v513
        %v518 = vsel %vm516, %v511, %v515
        %v519 = vsel %vm516, %v513, %v509
        %v520 = vsel %vm516, %v515, %v511
        %v521 = vmul.f32 %v504, %v517
        %v522 = vmul.f32 %v505, %v519
        %v523 = vmul.f32 %v506, %v518
        %v524 = vmul.f32 %v507, %v520
        %v525 = vadd.f32 %v499, %v521
        %v526 = vadd.f32 %v500, %v522
        %v527 = vadd.f32 %v501, %v523
        %v528 = vadd.f32 %v502, %v524
        %s529 = scalar_lea.vmem [#allocation5], 256
        %v530 = vld [vmem:[%s529] sm:$0xff]
        %v531 = vld [vmem:[%s529 + $0x8] sm:$0xff]
        %v532 = vld [vmem:[%s529 + $0x10] sm:$0xff]
        %v533 = vld [vmem:[%s529 + $0x18] sm:$0xff]
        %534 = vrot.lane.b32.xlu0 %v333, 111
        %v535 = vpop.permute.xlu0 %534
        %536 = vrot.lane.b32.xlu0 %v335, 111
        %v537 = vpop.permute.xlu0 %536
        %538 = vrot.lane.b32.xlu0 %v334, 111
        %v539 = vpop.permute.xlu0 %538
        %540 = vrot.lane.b32.xlu0 %v336, 111
        %v541 = vpop.permute.xlu0 %540
        %vm542 = vcmp.lt.s32.totalorder %v359, 111
        %v543 = vsel %vm542, %v535, %v539
        %v544 = vsel %vm542, %v537, %v541
        %v545 = vsel %vm542, %v539, %v535
        %v546 = vsel %vm542, %v541, %v537
        %v547 = vmul.f32 %v530, %v543
        %v548 = vmul.f32 %v531, %v545
        %v549 = vmul.f32 %v532, %v544
        %v550 = vmul.f32 %v533, %v546
        %v551 = vadd.f32 %v525, %v547
        %v552 = vadd.f32 %v526, %v548
        %v553 = vadd.f32 %v527, %v549
        %v554 = vadd.f32 %v528, %v550
        %555 = vset.pattern.permute.xlu0 1
        %556 = vperm.xlu0 %555, %v263
        %v557 = vpop.permute.xlu0 %556
        %559 = vset.pattern.permute.xlu0 1
        %560 = vperm.xlu0 %559, %v264
        %v561 = vpop.permute.xlu0 %560
        %v563 = vadd.f32 %v551, %v557
        %v564 = vadd.f32 %v552, %v557
        %v565 = vadd.f32 %v553, %v561
        %v566 = vadd.f32 %v554, %v561
        %v567 = vpack.c.bf16 %v565, %v563
        %v568 = vpack.c.bf16 %v566, %v564
        %569 = vset.pattern.permute.xlu0 2
        %570 = vperm.xlu0 %569, %v263
        %v571 = vpop.permute.xlu0 %570
        %573 = vset.pattern.permute.xlu0 2
        %574 = vperm.xlu0 %573, %v264
        %v575 = vpop.permute.xlu0 %574
        %v579 = vunpack.c.l.b16 %v261
        %v580 = vunpack.c.l.b16 %v262
        %v581 = vpack.c.b16 %v580, %v579
        %v583 = vsel %vm286, %v581, 0
        %585 = vmatprep.subr.bf16.mxu0 0
        %586 = vmatpush1.bf16.msra.mxu0 0
        %587 = vmatprep.subr.bf16.mxu0 0
        %588 = vmatpush1.bf16.msra.mxu0 0
        %589 = vmatprep.subr.bf16.mxu0 0
        %590 = vmatpush1.bf16.msra.mxu0 0
        %591 = vmatprep.subr.bf16.mxu0 0
        %592 = vmatpush1.bf16.msra.mxu0 0
        %593 = vmatprep.subr.bf16.mxu0 0
        %594 = vmatpush1.bf16.msra.mxu0 0
        %595 = vmatprep.subr.bf16.mxu0 0
        %596 = vmatpush1.bf16.msra.mxu0 0
        %597 = vmatprep.subr.bf16.mxu0 0
        %598 = vmatpush1.bf16.msra.mxu0 0
        %599 = vmatprep.subr.bf16.mxu0 %v568
        %600 = vmatpush1.bf16.msra.mxu0 %v567
        %601 = vmatprep.subr.bf16.mxu0 0
        %602 = vmatpush2.bf16.msra.mxu0 0
        %603 = vmatprep.subr.bf16.mxu0 0
        %604 = vmatpush2.bf16.msra.mxu0 0
        %605 = vmatprep.subr.bf16.mxu0 0
        %606 = vmatpush2.bf16.msra.mxu0 0
        %607 = vmatprep.subr.bf16.mxu0 0
        %608 = vmatpush2.bf16.msra.mxu0 0
        %609 = vmatprep.subr.bf16.mxu0 0
        %610 = vmatpush2.bf16.msra.mxu0 0
        %611 = vmatprep.subr.bf16.mxu0 0
        %612 = vmatpush2.bf16.msra.mxu0 0
        %613 = vmatprep.subr.bf16.mxu0 0
        %614 = vmatpush2.bf16.msra.mxu0 0
        %615 = vmatprep.subr.bf16.mxu0 0
        %616 = vmatpush2.bf16.msra.mxu0 0
        %617 = vmatprep.mubr.bf16.mxu0 0
        %618 = vmatmul.mubr.bf16.gmra.mxu0 %v583
        %v619 = vpop.f32.mrf.mxu0
        %v620 = vadd.f32 %v571, %v619
        %v621 = vpop.f32.mrf.mxu0
        %v622 = vadd.f32 %v571, %v621
        %v623 = vpop.f32.mrf.mxu0
        %v624 = vadd.f32 %v575, %v623
        %v625 = vpop.f32.mrf.mxu0
        %v626 = vadd.f32 %v575, %v625
        %627 = vdwg.mxu0
        %v628 = vmax.f32 %v620, 0.0
        %v629 = vmax.f32 %v622, 0.0
        %v630 = vmax.f32 %v624, 0.0
        %v631 = vmax.f32 %v626, 0.0
        %v632 = vld [vmem:[%s227] sm:$0xff]
        %v633 = vld [vmem:[%s227 + $0x8] sm:$0xff]
        %v634 = vld [vmem:[%s227 + $0x10] sm:$0xff]
        %v635 = vld [vmem:[%s227 + $0x18] sm:$0xff]
        %636 = vst [vmem:[%s257] sm:$0xff] %v632
        %637 = vst [vmem:[%s257 + $0x8] sm:$0xff] %v633
        %638 = vst [vmem:[%s257 + $0x20] sm:$0xff] %v634
        %639 = vst [vmem:[%s257 + $0x28] sm:$0xff] %v635
        %640 = vst [vmem:[%s257 + $0x10] sm:$0xff] %v628
        %641 = vst [vmem:[%s257 + $0x18] sm:$0xff] %v629
        %642 = vst [vmem:[%s257 + $0x30] sm:$0xff] %v630
        %643 = vst [vmem:[%s257 + $0x38] sm:$0xff] %v631
        %s644 = sand.u32 %s141, 1
        %s645 = scalar_lea.sflag [#allocation4], %s644
        %s646 = sand.u32 %s141, 1
        %s647 = smul.addr %s646, 64
        %s648 = scalar_lea.vmem [#allocation7], %s647
        // Predicated region
        $region49: #{tpu_custom_call.1} parent=39 // pred_check
          %p649 = pneg %p151
        $region50: #{tpu_custom_call.1} parent=39 // pred_check_branch
          %651 = sbr.rel (%p649) target = $region52
        $region51: #{tpu_custom_call.1} parent=39 // pred_region
          %s653 = ssub.s32 1024, 1024
          %654 = vsyncadd %s645, %s653
          %s655 = smul.addr %s23, 8
          %s656 = smul.addr %s655, 128
          %s657 = scalar_lea.hbm %s5, %s656
          %s658 = sshll.u32 %s648, 4
          %s659 = int_to_ptr.vmem [resolvable:$true] %s658
          %664 = dma.vmem_to_hbm [thread:$0]  %s659, 1024, %s657, %s645, 512, 512, 32
        $region52: #{tpu_custom_call.1} parent=39 // pred_fallthru
          _
      $region40: #{tpu_custom_call.1} parent=5 // pred_fallthru
        _
      %p665 = scmp.le.s32.totalorder 2, %s18
      // Predicated region
      $region53: #{tpu_custom_call.1} parent=5 // pred_check
        %p666 = pneg %p665
      $region54: #{tpu_custom_call.1} parent=5 // pred_check_branch
        %668 = sbr.rel (%p666) target = $region56
      $region55: #{tpu_custom_call.1} parent=5 // pred_region
        %s669 = ssub.s32 %s18, 2
        // Predicated region
        $region57: #{tpu_custom_call.1} parent=55 // pred_check
          %p670 = pneg %p157
        $region58: #{tpu_custom_call.1} parent=55 // pred_check_branch
          %672 = sbr.rel (%p670) target = $region60
        $region59: #{tpu_custom_call.1} parent=55 // pred_region
          %s673 = sand.u32 %s142, 1
          %s674 = scalar_lea.sflag [#allocation4], %s673
          %s675 = sand.u32 %s142, 1
          %s676 = smul.addr %s675, 64
          %s677 = scalar_lea.vmem [#allocation7], %s676
          %678 = dma.done %s674, 1024
        $region60: #{tpu_custom_call.1} parent=55 // pred_fallthru
          _
      $region56: #{tpu_custom_call.1} parent=5 // pred_fallthru
        _
    $region6: #{tpu_custom_call.1} parent=1 // loop_footer
      %s22 = sadd.s32 1, %s18
    $region7: #{tpu_custom_call.1} parent=1 // loop_footer_branch
      %17 = sbr.rel target = $region3
    $region8: #{tpu_custom_call.1} parent=1 // loop_exit
      _
    %679 = vsyncpa [#allocation3], 1
    %s680 = scalar_lea.sflag [#allocation3], 1
    %681 = vsyncpa %s680, 1
    %682 = vsyncpa [#allocation6], 1
    %683 = vsyncpa [#allocation4], 1
    %s684 = scalar_lea.sflag [#allocation4], 1
    %685 = vsyncpa %s684, 1

</llo_original>
